<compile_context>
chip_gen: v7x
topology: tpu7x:2x2x1
jax: 0.10.0
libtpu: 0.0.40
codegen_flags: <defaults>
</compile_context>

<pallas_src>
import functools

import jax
import jax.numpy as jnp
import numpy as np
from jax.experimental import pallas as pl
from jax.experimental.pallas import tpu as pltpu

_LANES = 128
_ROW_ALIGN = 8                      # sublane alignment for the T (row) axis
_FUSED_MAX_BYTES = 1 << 20          # <= 1 MiB of input -> single fused kernel


# ---------------------------------------------------------------------------
# Pass 1: per-batch masked partial statistics (sum, sum-of-squares, count).
# ---------------------------------------------------------------------------
def _stats_kernel(x_ref, stats_ref):
    # x_ref:     (1, 3, BR, 128) input block.
    # stats_ref: (1, 3, 3) per-batch accumulator, resident across the t axis:
    #            [..., 0]=sum, [..., 1]=sum of squares, [..., 2]=count.
    t = pl.program_id(1)

    @pl.when(t == 0)
    def _():
        stats_ref[...] = jnp.zeros_like(stats_ref)

    x = x_ref[0]                                        # (3, BR, 128)
    mask = jnp.logical_not(jnp.isnan(x))
    xz = jnp.where(mask, x, 0.0)

    def _chan_reduce(v):                                # (3, BR, 128) -> (3, 1)
        v = jnp.sum(v, axis=2, keepdims=True)           # lane reduce
        return jnp.sum(v, axis=1)                       # sublane reduce

    s = _chan_reduce(xz)
    ss = _chan_reduce(xz * xz)
    cnt = _chan_reduce(mask.astype(jnp.float32))
    stats_ref[...] += jnp.concatenate([s, ss, cnt], axis=1)[None]   # (1, 3, 3)


# ---------------------------------------------------------------------------
# Pass 2: normalize with precomputed mean / inv_std, zero NaNs of the result.
# ---------------------------------------------------------------------------
def _normalize_kernel(mean_ref, inv_ref, x_ref, o_ref):
    # mean_ref / inv_ref: (1, 3, 1, 1);  x_ref / o_ref: (1, 3, BR, 128)
    y = (x_ref[...] - mean_ref[...]) * inv_ref[...]
    o_ref[...] = jnp.where(jnp.isnan(y), 0.0, y)


# ---------------------------------------------------------------------------
# Fused single-pass kernel for inputs that fit comfortably in VMEM.
# ---------------------------------------------------------------------------
def _fused_kernel(x_ref, o_ref):
    x = x_ref[...]                                      # (B, 3, T, 128)
    mask = jnp.logical_not(jnp.isnan(x))
    xz = jnp.where(mask, x, 0.0)

    def _chan_reduce(v):                                # -> (1, 3, 1, 1)
        v = jnp.sum(v, axis=3, keepdims=True)           # lanes
        v = jnp.sum(v, axis=2, keepdims=True)           # sublanes
        return jnp.sum(v, axis=0, keepdims=True)        # batch

    s = _chan_reduce(xz)
    ss = _chan_reduce(xz * xz)
    cnt = _chan_reduce(mask.astype(jnp.float32))
    mean = s / cnt
    var = jnp.maximum(ss / cnt - mean * mean, 0.0)
    inv_std = jax.lax.rsqrt(var)                        # EUP; inf when std == 0
    y = (x - mean) * inv_std
    o_ref[...] = jnp.where(jnp.isnan(y), 0.0, y)


def _pick_block_rows(t_rows):
    # Largest block-row count (multiple of 8) that divides the padded row axis.
    for br in (512, 256, 128, 64, 32, 16, 8):
        if t_rows % br == 0:
            return br
    return 8


@functools.partial(jax.jit, static_argnames=("two_pass",))
def preprocessing_forward(x, two_pass=None):
    """x: (B, 3, H, W) or (B, 3, N). Returns (B, N, 3) float32 (PyTorch layout)."""
    B = x.shape[0]
    x3 = jnp.reshape(x, (B, 3, -1)).astype(jnp.float32)     # (B, 3, N)
    N = x3.shape[-1]

    # Pad N with NaNs (masked out of the stats, zeroed + cropped afterwards) so
    # the lane axis is a multiple of 128 and the row axis a multiple of 8.
    align = _LANES * _ROW_ALIGN
    n_pad = (-N) % align
    if n_pad:
        x3 = jnp.pad(x3, ((0, 0), (0, 0), (0, n_pad)), constant_values=np.nan)
    Np = N + n_pad
    T = Np // _LANES
    x4 = x3.reshape(B, 3, T, _LANES)                        # free reshape

    if two_pass is None:
        two_pass = x4.size * 4 > _FUSED_MAX_BYTES

    if not two_pass:
        # Whole problem resident in VMEM: one HBM pass, one kernel launch.
        y4 = pl.pallas_call(
            _fused_kernel,
            out_shape=jax.ShapeDtypeStruct((B, 3, T, _LANES), jnp.float32),
        )(x4)
    else:
        br = _pick_block_rows(T)
        tb = T // br

        # Pass 1: per-batch partial stats (B, 3, 3); batch axis parallel,
        # reduction axis last.
        stats = pl.pallas_call(
            _stats_kernel,
            out_shape=jax.ShapeDtypeStruct((B, 3, 3), jnp.float32),
            grid=(B, tb),
            in_specs=[pl.BlockSpec((1, 3, br, _LANES), lambda b, t: (b, 0, t, 0))],
            out_specs=pl.BlockSpec((1, 3, 3), lambda b, t: (b, 0, 0)),
            compiler_params=pltpu.CompilerParams(
                dimension_semantics=("parallel", "arbitrary")),
        )(x4)

        # Tiny cross-batch reduction + stats math hoisted into plain JAX.
        totals = jnp.sum(stats, axis=0)                     # (3, 3)
        cnt = totals[:, 2]
        mean = totals[:, 0] / cnt
        var = jnp.maximum(totals[:, 1] / cnt - mean * mean, 0.0)
        inv_std = 1.0 / jnp.sqrt(var)                       # inf when std == 0
        mean_b = mean.reshape(1, 3, 1, 1)
        inv_b = inv_std.reshape(1, 3, 1, 1)

        # Pass 2: streaming normalize, fully parallel grid, lane-dense output.
        y4 = pl.pallas_call(
            _normalize_kernel,
            out_shape=jax.ShapeDtypeStruct((B, 3, T, _LANES), jnp.float32),
            grid=(B, tb),
            in_specs=[
                pl.BlockSpec((1, 3, 1, 1), lambda b, t: (0, 0, 0, 0)),
                pl.BlockSpec((1, 3, 1, 1), lambda b, t: (0, 0, 0, 0)),
                pl.BlockSpec((1, 3, br, _LANES), lambda b, t: (b, 0, t, 0)),
            ],
            out_specs=pl.BlockSpec((1, 3, br, _LANES), lambda b, t: (b, 0, t, 0)),
            compiler_params=pltpu.CompilerParams(
                dimension_semantics=("parallel", "parallel")),
        )(mean_b, inv_b, x4)

    # Crop padding and present the PyTorch output layout (B, N, 3).
    y3 = y4.reshape(B, 3, Np)[:, :, :N]
    # TODO(synk): if a downstream consumer accepts channel-major (B, 3, N),
    # drop this transpose to save one HBM round-trip of y.
    return jnp.transpose(y3, (0, 2, 1))


def _reference(x_np):
    # Pure-numpy float64 reference with masked per-channel stats — equivalent
    # to the PyTorch flatten/view trick when NaNs occur for whole points.
    B = x_np.shape[0]
    x3 = x_np.reshape(B, 3, -1).transpose(0, 2, 1)          # (B, N, 3)
    mask = ~np.isnan(x3)
    cnt = mask.sum(axis=(0, 1))
    s = np.where(mask, x3, 0.0).sum(axis=(0, 1))
    ss = np.where(mask, x3 * x3, 0.0).sum(axis=(0, 1))
    mean = s / cnt
    std = np.sqrt(ss / cnt - mean * mean)
    y = (x3 - mean) / std
    y[np.isnan(y)] = 0.0
    return y


def _make_input(key, shape, nan_frac=0.1):
    k1, k2 = jax.random.split(key)
    x = jax.random.normal(k1, shape, dtype=jnp.float32) * 2.0 + 0.5
    # NaN-out whole points (all 3 channels), as the PyTorch view trick assumes.
    nan_pts = jax.random.bernoulli(k2, nan_frac, (shape[0], 1) + shape[2:])
    return jnp.where(nan_pts, jnp.nan, x)


if __name__ == "__main__":
    key = jax.random.PRNGKey(0)
    k1, k2 = jax.random.split(key)

    # Small input -> fused single-pass kernel path.
    x_small = _make_input(k1, (2, 3, 16, 16))
    y_small = jax.block_until_ready(preprocessing_forward(x_small))
    assert y_small.shape == (2, 16 * 16, 3) and y_small.dtype == jnp.float32
    np.testing.assert_allclose(
        np.asarray(y_small),
        _reference(np.asarray(x_small).astype(np.float64)),
        rtol=1e-4, atol=1e-4)

    # Slightly larger (still small) input forced through the tiled two-pass
    # path so the per-batch stats accumulation across the reduction grid axis
    # is also exercised.
    x_big = _make_input(k2, (2, 3, 50, 50))
    y_big = jax.block_until_ready(preprocessing_forward(x_big, two_pass=True))
    assert y_big.shape == (2, 50 * 50, 3) and y_big.dtype == jnp.float32
    np.testing.assert_allclose(
        np.asarray(y_big),
        _reference(np.asarray(x_big).astype(np.float64)),
        rtol=1e-4, atol=1e-4)

    print("KERNEL_OK")
</pallas_src>

<mosaic_0001>
module attributes {stable_mosaic.version = 11 : i64} {
  func.func @_fused_kernel(%arg0: memref<2x3x8x128xf32, #tpu.memory_space<vmem>>, %arg1: memref<2x3x8x128xf32, #tpu.memory_space<vmem>>) attributes {dimension_semantics = [], scalar_prefetch = 0 : i64, scratch_operands = 0 : i64, tpu.core_type = #tpu.core_type<tc>} {
    %c0 = arith.constant 0 : index
    %c0_0 = arith.constant 0 : index
    %c0_1 = arith.constant 0 : index
    %c0_2 = arith.constant 0 : index
    %0 = vector.load %arg0[%c0, %c0_0, %c0_1, %c0_2] : memref<2x3x8x128xf32, #tpu.memory_space<vmem>>, vector<2x3x8x128xf32>
    %1 = arith.cmpf one, %0, %0 : vector<2x3x8x128xf32>
    %cst = arith.constant dense<true> : vector<2x3x8x128xi1>
    %2 = arith.xori %1, %cst : vector<2x3x8x128xi1>
    %cst_3 = arith.constant 0.000000e+00 : f32
    %3 = vector.broadcast %cst_3 : f32 to vector<2x3x8x128xf32>
    %4 = arith.select %2, %0, %3 : vector<2x3x8x128xi1>, vector<2x3x8x128xf32>
    %cst_4 = arith.constant dense<0.000000e+00> : vector<2x3x8xf32>
    %5 = vector.multi_reduction <add>, %4, %cst_4 [3] : vector<2x3x8x128xf32> to vector<2x3x8xf32>
    %6 = vector.shape_cast %5 : vector<2x3x8xf32> to vector<2x3x8x1xf32>
    %cst_5 = arith.constant dense<0.000000e+00> : vector<2x3x1xf32>
    %7 = vector.multi_reduction <add>, %6, %cst_5 [2] : vector<2x3x8x1xf32> to vector<2x3x1xf32>
    %8 = vector.shape_cast %7 : vector<2x3x1xf32> to vector<2x3x1x1xf32>
    %cst_6 = arith.constant dense<0.000000e+00> : vector<3x1x1xf32>
    %9 = vector.multi_reduction <add>, %8, %cst_6 [0] : vector<2x3x1x1xf32> to vector<3x1x1xf32>
    %10 = vector.shape_cast %9 : vector<3x1x1xf32> to vector<1x3x1x1xf32>
    %11 = arith.mulf %4, %4 : vector<2x3x8x128xf32>
    %cst_7 = arith.constant dense<0.000000e+00> : vector<2x3x8xf32>
    %12 = vector.multi_reduction <add>, %11, %cst_7 [3] : vector<2x3x8x128xf32> to vector<2x3x8xf32>
    %13 = vector.shape_cast %12 : vector<2x3x8xf32> to vector<2x3x8x1xf32>
    %cst_8 = arith.constant dense<0.000000e+00> : vector<2x3x1xf32>
    %14 = vector.multi_reduction <add>, %13, %cst_8 [2] : vector<2x3x8x1xf32> to vector<2x3x1xf32>
    %15 = vector.shape_cast %14 : vector<2x3x1xf32> to vector<2x3x1x1xf32>
    %cst_9 = arith.constant dense<0.000000e+00> : vector<3x1x1xf32>
    %16 = vector.multi_reduction <add>, %15, %cst_9 [0] : vector<2x3x1x1xf32> to vector<3x1x1xf32>
    %17 = vector.shape_cast %16 : vector<3x1x1xf32> to vector<1x3x1x1xf32>
    %18 = arith.extui %2 : vector<2x3x8x128xi1> to vector<2x3x8x128xi32>
    %19 = arith.sitofp %18 : vector<2x3x8x128xi32> to vector<2x3x8x128xf32>
    %cst_10 = arith.constant dense<0.000000e+00> : vector<2x3x8xf32>
    %20 = vector.multi_reduction <add>, %19, %cst_10 [3] : vector<2x3x8x128xf32> to vector<2x3x8xf32>
    %21 = vector.shape_cast %20 : vector<2x3x8xf32> to vector<2x3x8x1xf32>
    %cst_11 = arith.constant dense<0.000000e+00> : vector<2x3x1xf32>
    %22 = vector.multi_reduction <add>, %21, %cst_11 [2] : vector<2x3x8x1xf32> to vector<2x3x1xf32>
    %23 = vector.shape_cast %22 : vector<2x3x1xf32> to vector<2x3x1x1xf32>
    %cst_12 = arith.constant dense<0.000000e+00> : vector<3x1x1xf32>
    %24 = vector.multi_reduction <add>, %23, %cst_12 [0] : vector<2x3x1x1xf32> to vector<3x1x1xf32>
    %25 = vector.shape_cast %24 : vector<3x1x1xf32> to vector<1x3x1x1xf32>
    %26 = arith.divf %10, %25 : vector<1x3x1x1xf32>
    %27 = arith.divf %17, %25 : vector<1x3x1x1xf32>
    %28 = arith.mulf %26, %26 : vector<1x3x1x1xf32>
    %29 = arith.subf %27, %28 : vector<1x3x1x1xf32>
    %cst_13 = arith.constant 0.000000e+00 : f32
    %30 = vector.broadcast %cst_13 : f32 to vector<1x3x1x1xf32>
    %31 = arith.maximumf %29, %30 : vector<1x3x1x1xf32>
    %32 = math.rsqrt %31 : vector<1x3x1x1xf32>
    %33 = vector.broadcast %26 : vector<1x3x1x1xf32> to vector<2x3x8x128xf32>
    %34 = arith.subf %0, %33 : vector<2x3x8x128xf32>
    %35 = vector.broadcast %32 : vector<1x3x1x1xf32> to vector<2x3x8x128xf32>
    %36 = arith.mulf %34, %35 : vector<2x3x8x128xf32>
    %37 = arith.cmpf one, %36, %36 : vector<2x3x8x128xf32>
    %cst_14 = arith.constant 0.000000e+00 : f32
    %38 = vector.broadcast %cst_14 : f32 to vector<2x3x8x128xf32>
    %39 = arith.select %37, %38, %36 : vector<2x3x8x128xi1>, vector<2x3x8x128xf32>
    %c0_15 = arith.constant 0 : index
    %c0_16 = arith.constant 0 : index
    %c0_17 = arith.constant 0 : index
    %c0_18 = arith.constant 0 : index
    %40 = vector.load %arg1[%c0_15, %c0_16, %c0_17, %c0_18] : memref<2x3x8x128xf32, #tpu.memory_space<vmem>>, vector<2x3x8x128xf32>
    tpu.vector_store %arg1[%c0_15, %c0_16, %c0_17, %c0_18], %39 {strides = array<i32>} : memref<2x3x8x128xf32, #tpu.memory_space<vmem>>, vector<2x3x8x128xf32>,
    return
  }
}

</mosaic_0001>

<llo_original>
// kernel: preprocessing_forward.1
$region0: #{preprocessing_forward.1}
  #allocation0 [shape = 'u32[]', space=smem, size = 0x4, offset = 0x4, fixed_abs, tag = 'smem constant byte address 0x4 - core index']
  #allocation1 [shape = 'u32[144,128]{1,0:T(1,128)}', space=vmem, size = 0x12000, scoped, tag = 'internal scratch']
  %s0 = inlined_call_operand.vmem [shape: f32[2,3,8,128], index: 0, kind: input, shape index: {}]
  %s1 = inlined_call_operand.vmem [shape: f32[2,3,8,128], index: 1, kind: output, shape index: {}]
  %s2 = sld [smem:[#allocation0]]
  $region14: #{preprocessing_forward.1} parent=0
    _
  %s4 = ssub.s32 1, %s2
  %s5 = scalar_select 0, %s4, %s2
  // Predicated region
  $region2: #{preprocessing_forward.1} parent=0 // pred_check
    _
  $region3: #{preprocessing_forward.1} parent=0 // pred_check_branch
    %7 = sbr.rel (0) target = $region5
  $region4: #{preprocessing_forward.1} parent=0 // pred_region
    _
  $region5: #{preprocessing_forward.1} parent=0 // pred_fallthru
    _
  %v8 = vld [vmem:[%s0] sm:$0xff]
  %v9 = vld [vmem:[%s0 + $0x8] sm:$0xff]
  %v10 = vld [vmem:[%s0 + $0x10] sm:$0xff]
  %v11 = vld [vmem:[%s0 + $0x18] sm:$0xff]
  %v12 = vld [vmem:[%s0 + $0x20] sm:$0xff]
  %v13 = vld [vmem:[%s0 + $0x28] sm:$0xff]
  %vm14 = vcmp.ne.f32.partialorder %v8, %v8
  %vm15 = vcmp.ne.f32.partialorder %v9, %v9
  %vm16 = vcmp.ne.f32.partialorder %v10, %v10
  %vm17 = vcmp.ne.f32.partialorder %v11, %v11
  %vm18 = vcmp.ne.f32.partialorder %v12, %v12
  %vm19 = vcmp.ne.f32.partialorder %v13, %v13
  %vm20 = vmxor %vm14, 1
  %vm21 = vmxor %vm15, 1
  %vm22 = vmxor %vm16, 1
  %vm23 = vmxor %vm17, 1
  %vm24 = vmxor %vm18, 1
  %vm25 = vmxor %vm19, 1
  %v26 = vsel %vm20, %v8, 0.0
  %v27 = vsel %vm21, %v9, 0.0
  %v28 = vsel %vm22, %v10, 0.0
  %v29 = vsel %vm23, %v11, 0.0
  %v30 = vsel %vm24, %v12, 0.0
  %v31 = vsel %vm25, %v13, 0.0
  %32 = vadd.xlane.f32.xlu0 %v26
  %v33 = vpop.xlane.xlu0 %32
  %34 = vadd.xlane.f32.xlu0 %v27
  %v35 = vpop.xlane.xlu0 %34
  %36 = vadd.xlane.f32.xlu0 %v28
  %v37 = vpop.xlane.xlu0 %36
  %38 = vadd.xlane.f32.xlu0 %v29
  %v39 = vpop.xlane.xlu0 %38
  %40 = vadd.xlane.f32.xlu0 %v30
  %v41 = vpop.xlane.xlu0 %40
  %42 = vadd.xlane.f32.xlu0 %v31
  %v43 = vpop.xlane.xlu0 %42
  %v44 = vrot.slane %v33, 4
  %v45 = vadd.f32 %v33, %v44
  %v46 = vrot.slane %v45, 2
  %v47 = vadd.f32 %v45, %v46
  %v48 = vrot.slane %v47, 1
  %v49 = vadd.f32 %v47, %v48
  %v50 = vrot.slane %v35, 4
  %v51 = vadd.f32 %v35, %v50
  %v52 = vrot.slane %v51, 2
  %v53 = vadd.f32 %v51, %v52
  %v54 = vrot.slane %v53, 1
  %v55 = vadd.f32 %v53, %v54
  %v56 = vrot.slane %v37, 4
  %v57 = vadd.f32 %v37, %v56
  %v58 = vrot.slane %v57, 2
  %v59 = vadd.f32 %v57, %v58
  %v60 = vrot.slane %v59, 1
  %v61 = vadd.f32 %v59, %v60
  %v62 = vrot.slane %v39, 4
  %v63 = vadd.f32 %v39, %v62
  %v64 = vrot.slane %v63, 2
  %v65 = vadd.f32 %v63, %v64
  %v66 = vrot.slane %v65, 1
  %v67 = vadd.f32 %v65, %v66
  %v68 = vrot.slane %v41, 4
  %v69 = vadd.f32 %v41, %v68
  %v70 = vrot.slane %v69, 2
  %v71 = vadd.f32 %v69, %v70
  %v72 = vrot.slane %v71, 1
  %v73 = vadd.f32 %v71, %v72
  %v74 = vrot.slane %v43, 4
  %v75 = vadd.f32 %v43, %v74
  %v76 = vrot.slane %v75, 2
  %v77 = vadd.f32 %v75, %v76
  %v78 = vrot.slane %v77, 1
  %v79 = vadd.f32 %v77, %v78
  %v80 = vadd.f32 %v49, %v67
  %v81 = vadd.f32 %v55, %v73
  %v82 = vadd.f32 %v61, %v79
  %v83 = vmul.f32 %v26, %v26
  %v84 = vmul.f32 %v27, %v27
  %v85 = vmul.f32 %v28, %v28
  %v86 = vmul.f32 %v29, %v29
  %v87 = vmul.f32 %v30, %v30
  %v88 = vmul.f32 %v31, %v31
  %89 = vadd.xlane.f32.xlu0 %v83
  %v90 = vpop.xlane.xlu0 %89
  %91 = vadd.xlane.f32.xlu0 %v84
  %v92 = vpop.xlane.xlu0 %91
  %93 = vadd.xlane.f32.xlu0 %v85
  %v94 = vpop.xlane.xlu0 %93
  %95 = vadd.xlane.f32.xlu0 %v86
  %v96 = vpop.xlane.xlu0 %95
  %97 = vadd.xlane.f32.xlu0 %v87
  %v98 = vpop.xlane.xlu0 %97
  %99 = vadd.xlane.f32.xlu0 %v88
  %v100 = vpop.xlane.xlu0 %99
  %v101 = vrot.slane %v90, 4
  %v102 = vadd.f32 %v90, %v101
  %v103 = vrot.slane %v102, 2
  %v104 = vadd.f32 %v102, %v103
  %v105 = vrot.slane %v104, 1
  %v106 = vadd.f32 %v104, %v105
  %v107 = vrot.slane %v92, 4
  %v108 = vadd.f32 %v92, %v107
  %v109 = vrot.slane %v108, 2
  %v110 = vadd.f32 %v108, %v109
  %v111 = vrot.slane %v110, 1
  %v112 = vadd.f32 %v110, %v111
  %v113 = vrot.slane %v94, 4
  %v114 = vadd.f32 %v94, %v113
  %v115 = vrot.slane %v114, 2
  %v116 = vadd.f32 %v114, %v115
  %v117 = vrot.slane %v116, 1
  %v118 = vadd.f32 %v116, %v117
  %v119 = vrot.slane %v96, 4
  %v120 = vadd.f32 %v96, %v119
  %v121 = vrot.slane %v120, 2
  %v122 = vadd.f32 %v120, %v121
  %v123 = vrot.slane %v122, 1
  %v124 = vadd.f32 %v122, %v123
  %v125 = vrot.slane %v98, 4
  %v126 = vadd.f32 %v98, %v125
  %v127 = vrot.slane %v126, 2
  %v128 = vadd.f32 %v126, %v127
  %v129 = vrot.slane %v128, 1
  %v130 = vadd.f32 %v128, %v129
  %v131 = vrot.slane %v100, 4
  %v132 = vadd.f32 %v100, %v131
  %v133 = vrot.slane %v132, 2
  %v134 = vadd.f32 %v132, %v133
  %v135 = vrot.slane %v134, 1
  %v136 = vadd.f32 %v134, %v135
  %v137 = vadd.f32 %v106, %v124
  %v138 = vadd.f32 %v112, %v130
  %v139 = vadd.f32 %v118, %v136
  %v140 = vsel %vm20, 1, 0
  %v141 = vsel %vm21, 1, 0
  %v142 = vsel %vm22, 1, 0
  %v143 = vsel %vm23, 1, 0
  %v144 = vsel %vm24, 1, 0
  %v145 = vsel %vm25, 1, 0
  %v146 = vcvt.s32.f32 %v140
  %v147 = vcvt.s32.f32 %v141
  %v148 = vcvt.s32.f32 %v142
  %v149 = vcvt.s32.f32 %v143
  %v150 = vcvt.s32.f32 %v144
  %v151 = vcvt.s32.f32 %v145
  %152 = vadd.xlane.f32.xlu0 %v146
  %v153 = vpop.xlane.xlu0 %152
  %154 = vadd.xlane.f32.xlu0 %v147
  %v155 = vpop.xlane.xlu0 %154
  %156 = vadd.xlane.f32.xlu0 %v148
  %v157 = vpop.xlane.xlu0 %156
  %158 = vadd.xlane.f32.xlu0 %v149
  %v159 = vpop.xlane.xlu0 %158
  %160 = vadd.xlane.f32.xlu0 %v150
  %v161 = vpop.xlane.xlu0 %160
  %162 = vadd.xlane.f32.xlu0 %v151
  %v163 = vpop.xlane.xlu0 %162
  %v164 = vrot.slane %v153, 4
  %v165 = vadd.f32 %v153, %v164
  %v166 = vrot.slane %v165, 2
  %v167 = vadd.f32 %v165, %v166
  %v168 = vrot.slane %v167, 1
  %v169 = vadd.f32 %v167, %v168
  %v170 = vrot.slane %v155, 4
  %v171 = vadd.f32 %v155, %v170
  %v172 = vrot.slane %v171, 2
  %v173 = vadd.f32 %v171, %v172
  %v174 = vrot.slane %v173, 1
  %v175 = vadd.f32 %v173, %v174
  %v176 = vrot.slane %v157, 4
  %v177 = vadd.f32 %v157, %v176
  %v178 = vrot.slane %v177, 2
  %v179 = vadd.f32 %v177, %v178
  %v180 = vrot.slane %v179, 1
  %v181 = vadd.f32 %v179, %v180
  %v182 = vrot.slane %v159, 4
  %v183 = vadd.f32 %v159, %v182
  %v184 = vrot.slane %v183, 2
  %v185 = vadd.f32 %v183, %v184
  %v186 = vrot.slane %v185, 1
  %v187 = vadd.f32 %v185, %v186
  %v188 = vrot.slane %v161, 4
  %v189 = vadd.f32 %v161, %v188
  %v190 = vrot.slane %v189, 2
  %v191 = vadd.f32 %v189, %v190
  %v192 = vrot.slane %v191, 1
  %v193 = vadd.f32 %v191, %v192
  %v194 = vrot.slane %v163, 4
  %v195 = vadd.f32 %v163, %v194
  %v196 = vrot.slane %v195, 2
  %v197 = vadd.f32 %v195, %v196
  %v198 = vrot.slane %v197, 1
  %v199 = vadd.f32 %v197, %v198
  %v200 = vadd.f32 %v169, %v187
  %v201 = vadd.f32 %v175, %v193
  %v202 = vadd.f32 %v181, %v199
  %v203 = vrcp.pop %v200
  %v204 = vmul.f32 %v80, %v203
  %v205 = vrcp.pop %v201
  %v206 = vmul.f32 %v81, %v205
  %v207 = vrcp.pop %v202
  %v208 = vmul.f32 %v82, %v207
  %v209 = vmul.f32 %v137, %v203
  %v210 = vmul.f32 %v138, %v205
  %v211 = vmul.f32 %v139, %v207
  %v212 = vmul.f32 %v204, %v204
  %v213 = vmul.f32 %v206, %v206
  %v214 = vmul.f32 %v208, %v208
  %v215 = vsub.f32 %v209, %v212
  %v216 = vsub.f32 %v210, %v213
  %v217 = vsub.f32 %v211, %v214
  %v218 = vmax.f32 %v215, 0.0
  %v219 = vmax.f32 %v216, 0.0
  %v220 = vmax.f32 %v217, 0.0
  %v221 = vrsqrt.pop %v218
  %v222 = vrsqrt.pop %v219
  %v223 = vrsqrt.pop %v220
  %v224 = vsub.f32 %v8, %v204
  %v225 = vsub.f32 %v9, %v206
  %v226 = vsub.f32 %v10, %v208
  %v227 = vsub.f32 %v11, %v204
  %v228 = vsub.f32 %v12, %v206
  %v229 = vsub.f32 %v13, %v208
  %v230 = vmul.f32 %v224, %v221
  %v231 = vmul.f32 %v225, %v222
  %v232 = vmul.f32 %v226, %v223
  %v233 = vmul.f32 %v227, %v221
  %v234 = vmul.f32 %v228, %v222
  %v235 = vmul.f32 %v229, %v223
  %vm236 = vcmp.ne.f32.partialorder %v230, %v230
  %vm237 = vcmp.ne.f32.partialorder %v231, %v231
  %vm238 = vcmp.ne.f32.partialorder %v232, %v232
  %vm239 = vcmp.ne.f32.partialorder %v233, %v233
  %vm240 = vcmp.ne.f32.partialorder %v234, %v234
  %vm241 = vcmp.ne.f32.partialorder %v235, %v235
  %v242 = vsel %vm236, 0.0, %v230
  %v243 = vsel %vm237, 0.0, %v231
  %v244 = vsel %vm238, 0.0, %v232
  %v245 = vsel %vm239, 0.0, %v233
  %v246 = vsel %vm240, 0.0, %v234
  %v247 = vsel %vm241, 0.0, %v235
  %248 = vst [vmem:[%s1] sm:$0xff] %v242
  %249 = vst [vmem:[%s1 + $0x8] sm:$0xff] %v243
  %250 = vst [vmem:[%s1 + $0x10] sm:$0xff] %v244
  %251 = vst [vmem:[%s1 + $0x18] sm:$0xff] %v245
  %252 = vst [vmem:[%s1 + $0x20] sm:$0xff] %v246
  %253 = vst [vmem:[%s1 + $0x28] sm:$0xff] %v247
  // Predicated region
  $region6: #{preprocessing_forward.1} parent=0 // pred_check
    _
  $region7: #{preprocessing_forward.1} parent=0 // pred_check_branch
    %255 = sbr.rel (0) target = $region9
  $region8: #{preprocessing_forward.1} parent=0 // pred_region
    _
  $region9: #{preprocessing_forward.1} parent=0 // pred_fallthru
    _
  // Predicated region
  $region10: #{preprocessing_forward.1} parent=0 // pred_check
    _
  $region11: #{preprocessing_forward.1} parent=0 // pred_check_branch
    %257 = sbr.rel (0) target = $region13
  $region12: #{preprocessing_forward.1} parent=0 // pred_region
    _
  $region13: #{preprocessing_forward.1} parent=0 // pred_fallthru
    _

</llo_original>
